<compile_context>
chip_gen: v7x
topology: tpu7x:2x2x1
jax: 0.10.0
libtpu: 0.0.40
codegen_flags: <defaults>
</compile_context>

<pallas_src>
import math
import functools

import jax
import jax.numpy as jnp
from jax.experimental import pallas as pl
from jax.experimental.pallas import tpu as pltpu


def _round_up(a: int, b: int) -> int:
    return ((a + b - 1) // b) * b


def _vmem_capacity_bytes() -> int:
    """Per-core VMEM capacity; conservative fallback = v7x (64 MiB/TC)."""
    try:
        return int(pltpu.get_tpu_info().vmem_capacity_bytes)
    except Exception:
        return 64 << 20


# ---------------------------------------------------------------------------
# Kernel 1: small vocab — table resident in VMEM scratch, one-hot MXU gather
# ---------------------------------------------------------------------------
def _onehot_kernel(idx_ref, emb_hbm, out_ref, emb_vmem, iota_vmem, load_sem):
    """idx_ref  : (TB, 1) int32 VMEM tile of flattened token ids
       emb_hbm  : (V, D)  table left in HBM (memory_space=pl.ANY)
       out_ref  : (TB, D) output tile
       emb_vmem : (V, D)  VMEM scratch — single-buffered resident table copy
       iota_vmem: (TB, V) int32 scratch — lane iota, built once at step 0
       load_sem : (1,)    DMA semaphore for the one-time table load
    """
    step = pl.program_id(0)

    # Start the one-time table load and, while it streams in, build the
    # (TB, V) lane iota once.  Both persist in scratch across grid steps
    # (grid axis is "arbitrary" => sequential on one core).
    @pl.when(step == 0)
    def _start_table_load():
        pltpu.make_async_copy(emb_hbm, emb_vmem, load_sem.at[0]).start()
        iota_vmem[...] = jax.lax.broadcasted_iota(
            jnp.int32, iota_vmem.shape, 1)

    idx = idx_ref[...]                                       # (TB, 1) int32
    one_hot = (idx == iota_vmem[...]).astype(emb_vmem.dtype)  # exact 0/1

    # Only now do we need the table contents.
    @pl.when(step == 0)
    def _finish_table_load():
        pltpu.make_async_copy(emb_hbm, emb_vmem, load_sem.at[0]).wait()

    out_ref[...] = jnp.dot(
        one_hot, emb_vmem[...], preferred_element_type=jnp.float32
    ).astype(out_ref.dtype)


# ---------------------------------------------------------------------------
# Kernel 2: large vocab — HBM table, scalar-prefetch DMA rows straight to out
# ---------------------------------------------------------------------------
_ISSUE_UNROLL = 8  # token_block is always a multiple of 8


def _gather_kernel(idx_ref, emb_hbm, out_ref, copy_sem):
    """idx_ref : (N_pad,) int32 in SMEM (scalar prefetch)
       emb_hbm : (V, D) table in HBM (memory_space=pl.ANY)
       out_ref : (TB, D) pipelined output tile — rows are DMA'd directly here
       copy_sem: (1,)   shared DMA semaphore (all row copies are equal-sized)
    """
    tb = out_ref.shape[0]
    base = pl.program_id(0) * tb

    # Issue all TB row copies (unrolled 8-wide so SMEM reads, address math and
    # descriptor pushes pipeline), each landing directly in the output block.
    def _issue_chunk(c, carry):
        j0 = pl.multiple_of(c * _ISSUE_UNROLL, _ISSUE_UNROLL)
        for u in range(_ISSUE_UNROLL):
            j = j0 + u
            row = idx_ref[base + j]
            pltpu.make_async_copy(
                emb_hbm.at[row], out_ref.at[j], copy_sem.at[0]).start()
        return carry

    jax.lax.fori_loop(0, tb // _ISSUE_UNROLL, _issue_chunk, 0)

    # All TB row copies are exactly D*itemsize bytes on the same DMA
    # semaphore, so a single wait for the whole (TB, D) block's bytes drains
    # them.  The block's HBM write-back is pipelined by the out BlockSpec.
    pltpu.make_async_copy(out_ref, out_ref, copy_sem.at[0]).wait()


# Crossover: the one-hot path is VALU-bound (compare+cast over TB x V every
# step) and an f32 one-hot matmul is multi-pass on v5e, so keep it only for
# genuinely small vocabs; everything realistic takes the row-DMA gather.
_ONEHOT_MAX_VOCAB = 512
_ONEHOT_MAX_TABLE_BYTES = 4 << 20


@functools.partial(jax.jit, static_argnames=("token_block", "method"))
def embedding_lookup(x, embedding, *, token_block=256, method="auto"):
    """Pallas equivalent of `embedding[x]` (torch advanced indexing).

    Out-of-range token ids are clamped to [0, vocab-1] (torch would raise).
    method: "auto" | "onehot" | "gather".
    """
    orig_shape = x.shape
    v, d = embedding.shape
    itemsize = jnp.dtype(embedding.dtype).itemsize

    flat = jnp.clip(x.reshape(-1).astype(jnp.int32), 0, v - 1)
    n = flat.shape[0]

    vmem_cap = _vmem_capacity_bytes()
    # ~40 MiB on v7x (64 MiB/TC), ~80 MiB on v5e/v6e (128 MiB).
    vmem_hi = max(16 << 20, (vmem_cap * 5) // 8)

    # Token block: multiple of 8 (sublane / issue-unroll granule), no larger
    # than the token count, capped so the double-buffered output blocks use at
    # most ~1/4 of this generation's VMEM.
    max_tb = max(8, (((vmem_cap // 4) // max(1, 2 * d * itemsize)) // 8) * 8)
    tb = max(8, _round_up(int(token_block), 8))
    tb = min(tb, _round_up(n, 8), max_tb)

    n_pad = _round_up(n, tb)
    flat = jnp.pad(flat, (0, n_pad - n))      # padded ids -> row 0 (sliced off)
    grid = (n_pad // tb,)

    table_bytes = v * d * itemsize
    use_onehot = method == "onehot" or (
        method == "auto"
        and v <= _ONEHOT_MAX_VOCAB
        and table_bytes <= _ONEHOT_MAX_TABLE_BYTES)

    if use_onehot:
        needed = (table_bytes                    # single-buffered table scratch
                  + tb * v * (4 + itemsize)      # iota scratch + one-hot temps
                  + 2 * tb * d * itemsize        # double-buffered output blocks
                  + 2 * tb * 128 * 4             # lane-padded (TB,1) idx blocks
                  + (4 << 20))                   # headroom
        vmem_limit = int(min(max(needed, 16 << 20), vmem_hi))
        out = pl.pallas_call(
            _onehot_kernel,
            out_shape=jax.ShapeDtypeStruct((n_pad, d), embedding.dtype),
            grid_spec=pltpu.PrefetchScalarGridSpec(
                num_scalar_prefetch=0,
                grid=grid,
                in_specs=[
                    pl.BlockSpec((tb, 1), lambda i: (i, 0)),   # per-step ids
                    pl.BlockSpec(memory_space=pl.ANY),         # table in HBM
                ],
                out_specs=pl.BlockSpec((tb, d), lambda i: (i, 0)),
                scratch_shapes=[
                    pltpu.VMEM((v, d), embedding.dtype),
                    pltpu.VMEM((tb, v), jnp.int32),
                    pltpu.SemaphoreType.DMA((1,)),
                ],
            ),
            compiler_params=pltpu.CompilerParams(
                # "arbitrary": the step-0 table/iota loads into scratch must be
                # seen by every later step (sequential, single core).
                dimension_semantics=("arbitrary",),
                vmem_limit_bytes=vmem_limit,
            ),
            cost_estimate=pl.CostEstimate(
                flops=int(2 * n_pad * v * d),
                transcendentals=0,
                bytes_accessed=int(
                    table_bytes + n_pad * d * itemsize + n_pad * 4),
            ),
        )(flat.reshape(n_pad, 1), embedding)
    else:
        # TODO(synk): for token counts whose flat index array exceeds SMEM
        # capacity (multi-million tokens), chunk the token axis across calls.
        needed = 2 * tb * d * itemsize + (2 << 20)
        vmem_limit = int(min(max(needed, 16 << 20), vmem_hi))
        out = pl.pallas_call(
            _gather_kernel,
            out_shape=jax.ShapeDtypeStruct((n_pad, d), embedding.dtype),
            grid_spec=pltpu.PrefetchScalarGridSpec(
                num_scalar_prefetch=1,                         # ids -> SMEM
                grid=grid,
                in_specs=[pl.BlockSpec(memory_space=pl.ANY)],  # table in HBM
                out_specs=pl.BlockSpec((tb, d), lambda i, idx: (i, 0)),
                scratch_shapes=[pltpu.SemaphoreType.DMA((1,))],
            ),
            compiler_params=pltpu.CompilerParams(
                dimension_semantics=("parallel",),
                vmem_limit_bytes=vmem_limit,
            ),
            cost_estimate=pl.CostEstimate(
                flops=0,
                transcendentals=0,
                bytes_accessed=int(2 * n_pad * d * itemsize + n_pad * 4),
            ),
        )(flat, embedding)

    return out[:n].reshape(*orig_shape, d)


def init_embedding(key, vocab_dim, dim, dtype=jnp.float32):
    """Matches torch.nn.init.kaiming_uniform_(a=sqrt(5)) for (vocab, dim):
    gain = sqrt(1/3), fan_in = dim, bound = sqrt(3)*gain/sqrt(fan_in) = 1/sqrt(dim).
    """
    bound = 1.0 / math.sqrt(dim)
    return jax.random.uniform(
        key, (vocab_dim, dim), dtype=dtype, minval=-bound, maxval=bound)


if __name__ == "__main__":
    key = jax.random.PRNGKey(0)
    k1, k2, k3, k4, k5, k6 = jax.random.split(key, 6)

    # --- Test 1: small vocab -> resident-table one-hot MXU path (2 grid steps)
    B1, S1, V1, D1 = 2, 256, 64, 128
    emb1 = init_embedding(k1, V1, D1)
    x1 = jax.random.randint(k2, (B1, S1), 0, V1, dtype=jnp.int32)
    out1 = jax.block_until_ready(embedding_lookup(x1, emb1, token_block=256))
    ref1 = jnp.take(emb1, x1.reshape(-1), axis=0).reshape(B1, S1, D1)
    assert out1.shape == (B1, S1, D1), out1.shape
    assert out1.dtype == emb1.dtype, out1.dtype
    assert jnp.allclose(out1, ref1, atol=1e-6), "one-hot path mismatch"

    # --- Test 2: HBM table + direct-to-output DMA gather path (2 grid steps)
    B2, S2, V2, D2 = 2, 128, 512, 256
    emb2 = init_embedding(k3, V2, D2)
    x2 = jax.random.randint(k4, (B2, S2), 0, V2, dtype=jnp.int32)
    out2 = jax.block_until_ready(
        embedding_lookup(x2, emb2, token_block=128, method="gather"))
    ref2 = jnp.take(emb2, x2.reshape(-1), axis=0).reshape(B2, S2, D2)
    assert out2.shape == (B2, S2, D2), out2.shape
    assert out2.dtype == emb2.dtype, out2.dtype
    assert jnp.allclose(out2, ref2, atol=0.0), "gather path mismatch"

    # --- Test 3: gather path with a feature dim that is NOT a multiple of 128
    #     (no per-call table padding; rows DMA'd at their true width)
    B3, S3, V3, D3 = 1, 64, 300, 72
    emb3 = init_embedding(k5, V3, D3)
    x3 = jax.random.randint(k6, (B3, S3), 0, V3, dtype=jnp.int32)
    out3 = jax.block_until_ready(
        embedding_lookup(x3, emb3, token_block=64, method="gather"))
    ref3 = jnp.take(emb3, x3.reshape(-1), axis=0).reshape(B3, S3, D3)
    assert out3.shape == (B3, S3, D3), out3.shape
    assert out3.dtype == emb3.dtype, out3.dtype
    assert jnp.allclose(out3, ref3, atol=0.0), "unaligned-D gather mismatch"

    print("KERNEL_OK")
</pallas_src>

<mosaic_0001>
module attributes {stable_mosaic.version = 11 : i64} {
  func.func @_onehot_kernel(%arg0: i32, %arg1: memref<256x1xi32, #tpu.memory_space<vmem>>, %arg2: memref<64x128xf32, #tpu.memory_space<any>>, %arg3: memref<256x128xf32, #tpu.memory_space<vmem>>, %arg4: memref<64x128xf32, #tpu.memory_space<vmem>>, %arg5: memref<256x64xi32, #tpu.memory_space<vmem>>, %arg6: memref<1x!tpu.dma_semaphore, #tpu.memory_space<semaphore_mem>>) attributes {dimension_semantics = [#tpu.dimension_semantics<arbitrary>], iteration_bounds = array<i64: 2>, scalar_prefetch = 0 : i64, scratch_operands = 3 : i64, tpu.core_type = #tpu.core_type<tc>, window_params = [{transform_indices = @transform_0, window_bounds = array<i64: 256, 1>}, {}, {transform_indices = @transform_2, window_bounds = array<i64: 256, 128>}]} {
    %c0_i32 = arith.constant 0 : i32
    %0 = arith.cmpi eq, %arg0, %c0_i32 : i32
    %1 = arith.extui %0 : i1 to i32
    %c0_i32_0 = arith.constant 0 : i32
    %2 = arith.cmpi ne, %1, %c0_i32_0 : i32
    scf.if %2 {
      %c0_i32_10 = arith.constant 0 : i32
      %15 = tpu.memref_slice %arg6[%c0_i32_10] : memref<1x!tpu.dma_semaphore, #tpu.memory_space<semaphore_mem>> -> memref<1x!tpu.dma_semaphore, #tpu.memory_space<semaphore_mem>>
      %16 = tpu.memref_squeeze %15 : memref<1x!tpu.dma_semaphore, #tpu.memory_space<semaphore_mem>> -> memref<!tpu.dma_semaphore, #tpu.memory_space<semaphore_mem>>
      tpu.enqueue_dma source(%arg2 : memref<64x128xf32, #tpu.memory_space<any>>) target(%arg4 : memref<64x128xf32, #tpu.memory_space<vmem>>) target_semaphore(%16 : memref<!tpu.dma_semaphore, #tpu.memory_space<semaphore_mem>>)
      %17 = tpu.iota {dimensions = array<i32: 1>} : vector<256x64xi32>
      %c0_11 = arith.constant 0 : index
      %c0_12 = arith.constant 0 : index
      %18 = vector.load %arg5[%c0_11, %c0_12] : memref<256x64xi32, #tpu.memory_space<vmem>>, vector<256x64xi32>
      tpu.vector_store %arg5[%c0_11, %c0_12], %17 {strides = array<i32>} : memref<256x64xi32, #tpu.memory_space<vmem>>, vector<256x64xi32>,
    } else {
    }
    %c0 = arith.constant 0 : index
    %c0_1 = arith.constant 0 : index
    %3 = vector.load %arg1[%c0, %c0_1] : memref<256x1xi32, #tpu.memory_space<vmem>>, vector<256x1xi32>
    %c0_2 = arith.constant 0 : index
    %c0_3 = arith.constant 0 : index
    %4 = vector.load %arg5[%c0_2, %c0_3] : memref<256x64xi32, #tpu.memory_space<vmem>>, vector<256x64xi32>
    %5 = vector.broadcast %3 : vector<256x1xi32> to vector<256x64xi32>
    %6 = arith.cmpi eq, %5, %4 : vector<256x64xi32>
    %7 = arith.extui %6 : vector<256x64xi1> to vector<256x64xi32>
    %8 = arith.sitofp %7 : vector<256x64xi32> to vector<256x64xf32>
    %c0_i32_4 = arith.constant 0 : i32
    %9 = arith.cmpi eq, %arg0, %c0_i32_4 : i32
    %10 = arith.extui %9 : i1 to i32
    %c0_i32_5 = arith.constant 0 : i32
    %11 = arith.cmpi ne, %10, %c0_i32_5 : i32
    scf.if %11 {
      %c0_i32_10 = arith.constant 0 : i32
      %15 = tpu.memref_slice %arg6[%c0_i32_10] : memref<1x!tpu.dma_semaphore, #tpu.memory_space<semaphore_mem>> -> memref<1x!tpu.dma_semaphore, #tpu.memory_space<semaphore_mem>>
      %16 = tpu.memref_squeeze %15 : memref<1x!tpu.dma_semaphore, #tpu.memory_space<semaphore_mem>> -> memref<!tpu.dma_semaphore, #tpu.memory_space<semaphore_mem>>
      tpu.wait_dma2 semaphore(%16 : memref<!tpu.dma_semaphore, #tpu.memory_space<semaphore_mem>>) src(%arg2 : memref<64x128xf32, #tpu.memory_space<any>>) dst(%arg4 : memref<64x128xf32, #tpu.memory_space<vmem>>)
    } else {
    }
    %c0_6 = arith.constant 0 : index
    %c0_7 = arith.constant 0 : index
    %12 = vector.load %arg4[%c0_6, %c0_7] : memref<64x128xf32, #tpu.memory_space<vmem>>, vector<64x128xf32>
    %cst = arith.constant dense<0.000000e+00> : vector<256x128xf32>
    %13 = tpu.matmul %8, %12, %cst {dimension_numbers = #tpu.dot_dimension_numbers<[1], [0], [0], [1], [0, 0, 1, 1], [], []>} : vector<256x64xf32>, vector<64x128xf32>, vector<256x128xf32> -> vector<256x128xf32>
    %c0_8 = arith.constant 0 : index
    %c0_9 = arith.constant 0 : index
    %14 = vector.load %arg3[%c0_8, %c0_9] : memref<256x128xf32, #tpu.memory_space<vmem>>, vector<256x128xf32>
    tpu.vector_store %arg3[%c0_8, %c0_9], %13 {strides = array<i32>} : memref<256x128xf32, #tpu.memory_space<vmem>>, vector<256x128xf32>,
    return
  }
  func.func @transform_0(%arg0: i32) -> (i32, i32) {
    %c0_i32 = arith.constant 0 : i32
    %c0_i32_0 = arith.constant 0 : i32
    return %arg0, %c0_i32 : i32, i32
  }
  func.func @transform_2(%arg0: i32) -> (i32, i32) {
    %c0_i32 = arith.constant 0 : i32
    %c0_i32_0 = arith.constant 0 : i32
    return %arg0, %c0_i32 : i32, i32
  }
}

</mosaic_0001>

<llo_original>
// kernel: embedding_lookup.1
$region0: #{embedding_lookup.1}
  #allocation0 [shape = 'u32[]', space=smem, size = 0x4, offset = 0x4, fixed_abs, tag = 'smem constant byte address 0x4 - core index']
  #allocation1 [shape = 'u32[144,128]{1,0:T(1,128)}', space=vmem, size = 0x12000, scoped, tag = 'internal scratch']
  #allocation2 [shape = 'f32[64,128]{1,0:T(8,128)}', space=vmem, size = 0x8000, scoped, tag = 'scratch operand']
  #allocation3 [shape = 's32[256,64]{1,0:T(8,128)}', space=vmem, size = 0x20000, scoped, tag = 'scratch operand']
  #allocation4 [shape = 's32[1]{0}', space=sflag, size = 0x4, scoped, tag = 'scratch operand']
  #allocation7 [shape = 's32[]', space=sflag, size = 0x4, offset = 0, fixed_abs, tag = 'sflag constant byte address 0x0 - dummy sync flag']
  %s0 = inlined_call_operand.vmem [shape: s32[512,1], index: 0, kind: input, shape index: {}]
  %s1 = inlined_call_operand.vmem [shape: f32[64,128], index: 1, kind: input, shape index: {}]
  %s2 = inlined_call_operand.hbm [shape: f32[512,128], index: 2, kind: output, shape index: {}]
  %s3 = sld [smem:[#allocation0]]
  $region79: #{embedding_lookup.1} parent=0
    _
  %s5 = ssub.s32 1, %s3
  %s6 = scalar_select 0, %s5, %s3
  $region1: #{embedding_lookup.1} parent=0
    #allocation5 [shape = 'u8[262144]{0}', space=vmem, size = 0x40000, scoped, tag = 'output window, operand 0']
    #allocation6 [shape = 's32[2]{0}', space=sflag, size = 0x8, scoped, tag = 'scoped memory for embedding_lookup.1']
    %7 = vsyncpa [#allocation6], 0
    %s8 = scalar_lea.sflag [#allocation6], 1
    %9 = vsyncpa %s8, 0
    loop: start=0, step=1, limit=4
    $region2: #{embedding_lookup.1} parent=1 // loop_pre_header
      _
    $region3: #{embedding_lookup.1} parent=1 // loop_header
      %s11 = sphi 0, %s15
      %p12 = scmp.ge.s32.totalorder %s11, 4
      %s21 = sphi 0, %s23
      %s24 = sphi 0, %s21
      %s25 = sphi 0, %s24
      %s41 = sphi 0, %s25
      %s47 = sphi 0, %s49
      %s50 = sphi 0, %s47
      %s51 = sphi 0, %s50
      %s67 = sphi 0, %s51
    $region4: #{embedding_lookup.1} parent=1 // loop_header_branch
      %14 = sbr.rel (%p12) target = $region8
    $region5: #{embedding_lookup.1} parent=1 // loop_body
      %s16 = ssub.s32 %s11, 1
      %s17 = ssub.s32 %s11, 2
      %s18 = sadd.s32 %s11, 1
      %s19 = ssub.s32 %s11, %s18
      %p20 = scmp.eq.s32.totalorder %s19, 0
      %s22 = sadd.s32 %s21, 1
      %s23 = scalar_select %p20, %s21, %s22
      %p26 = pneg %p20
      %p27 = scmp.eq.s32.totalorder %s11, 1
      %p28 = por %p26, %p27
      %p29 = scmp.ne.s32.totalorder %s21, %s24
      %p30 = scmp.eq.s32.totalorder %s11, 0
      %p31 = por %p29, %p30
      %p32 = scmp.ne.s32.totalorder %s21, %s24
      %p33 = scmp.eq.s32.totalorder %s16, 1
      %p34 = por %p32, %p33
      %p35 = scmp.ne.s32.totalorder %s24, %s25
      %p36 = scmp.eq.s32.totalorder %s16, 0
      %p37 = por %p35, %p36
      %p38 = scmp.ne.s32.totalorder %s24, %s25
      %p39 = scmp.eq.s32.totalorder %s17, 1
      %p40 = por %p38, %p39
      %p42 = scmp.ne.s32.totalorder %s25, %s41
      %p43 = scmp.eq.s32.totalorder %s17, 0
      %p44 = por %p42, %p43
      %s45 = ssub.s32 %s11, %s18
      %p46 = scmp.eq.s32.totalorder %s45, 0
      %s48 = sadd.s32 %s47, 1
      %s49 = scalar_select %p46, %s47, %s48
      %p52 = pneg %p46
      %p53 = scmp.eq.s32.totalorder %s11, 1
      %p54 = por %p52, %p53
      %p55 = scmp.ne.s32.totalorder %s47, %s50
      %p56 = scmp.eq.s32.totalorder %s11, 0
      %p57 = por %p55, %p56
      %p58 = scmp.ne.s32.totalorder %s47, %s50
      %p59 = scmp.eq.s32.totalorder %s16, 1
      %p60 = por %p58, %p59
      %p61 = scmp.ne.s32.totalorder %s50, %s51
      %p62 = scmp.eq.s32.totalorder %s16, 0
      %p63 = por %p61, %p62
      %p64 = scmp.ne.s32.totalorder %s50, %s51
      %p65 = scmp.eq.s32.totalorder %s17, 1
      %p66 = por %p64, %p65
      %p68 = scmp.ne.s32.totalorder %s51, %s67
      %p69 = scmp.eq.s32.totalorder %s17, 0
      %p70 = por %p68, %p69
      %p71 = scmp.le.s32.totalorder 1, %s11
      %p72 = scmp.lt.s32.totalorder %s11, 3
      %p73 = pnand %p71, %p72
      %p74 = pneg %p73
      // Predicated region
      $region9: #{embedding_lookup.1} parent=5 // pred_check
        _
      $region10: #{embedding_lookup.1} parent=5 // pred_check_branch
        %76 = sbr.rel (%p73) target = $region12
      $region11: #{embedding_lookup.1} parent=5 // pred_region
        %s77 = ssub.s32 %s11, 1
      $region12: #{embedding_lookup.1} parent=5 // pred_fallthru
        _
      %p78 = scmp.lt.s32.totalorder %s11, 2
      // Predicated region
      $region13: #{embedding_lookup.1} parent=5 // pred_check
        %p79 = pneg %p78
      $region14: #{embedding_lookup.1} parent=5 // pred_check_branch
        %81 = sbr.rel (%p79) target = $region16
      $region15: #{embedding_lookup.1} parent=5 // pred_region
        // Predicated region
        $region17: #{embedding_lookup.1} parent=15 // pred_check
          %p82 = pneg %p31
        $region18: #{embedding_lookup.1} parent=15 // pred_check_branch
          %84 = sbr.rel (%p82) target = $region20
        $region19: #{embedding_lookup.1} parent=15 // pred_region
          %s85 = smul.u32 32, %s11
          %p86 = scmp.lt.s32.totalorder %s85, 63
          %s87 = scalar_select %p86, %s85, 63
          %s88 = smul.addr %s87, 8
          %s89 = scalar_lea.vmem %s0, %s88
          %s90 = smul.u32 32, %s11
        $region20: #{embedding_lookup.1} parent=15 // pred_fallthru
          _
      $region16: #{embedding_lookup.1} parent=5 // pred_fallthru
        _
      %p91 = scmp.le.s32.totalorder 1, %s11
      %p92 = scmp.lt.s32.totalorder %s11, 3
      %p93 = pnand %p91, %p92
      %p94 = pneg %p93
      // Predicated region
      $region21: #{embedding_lookup.1} parent=5 // pred_check
        _
      $region22: #{embedding_lookup.1} parent=5 // pred_check_branch
        %96 = sbr.rel (%p93) target = $region24
      $region23: #{embedding_lookup.1} parent=5 // pred_region
        %s97 = ssub.s32 %s11, 1
        %s98 = smul.u32 32, %s16
        %p99 = scmp.lt.s32.totalorder %s98, 63
        %s100 = scalar_select %p99, %s98, 63
        %s101 = smul.addr %s100, 8
        %s102 = scalar_lea.vmem %s0, %s101
        %p103 = pneg %p37
        %p104 = pneg %p34
        %p105 = pneg %p63
        %p106 = pneg %p60
        %s107 = sand.u32 %s50, 1
        %s108 = scalar_lea.sflag [#allocation6], %s107
        %s109 = sand.u32 %s50, 1
        %s110 = smul.addr %s109, 256
        %s111 = scalar_lea.vmem [#allocation5], %s110
        %s112 = smul.u32 32, %s16
        %p113 = scmp.lt.s32.totalorder %s112, 63
        %s114 = scalar_select %p113, %s112, 63
        %s115 = smul.addr %s114, 8
        %s116 = scalar_lea.vmem %s0, %s115
        %s117 = smul.u32 32, %s16
        %s118 = smul.u32 32, %s16
        %p119 = scmp.eq.s32.totalorder %s16, 0
        // Predicated region
        $region25: #{embedding_lookup.1} parent=23 // pred_check
          %p120 = pneg %p119
        $region26: #{embedding_lookup.1} parent=23 // pred_check_branch
          %122 = sbr.rel (%p120) target = $region28
        $region27: #{embedding_lookup.1} parent=23 // pred_region
          %p124 = scmp.lt.u32.totalorder 64, 8
          %p125 = pneg %p124
          // Predicated region
          $region29: #{embedding_lookup.1} parent=27 // pred_check
            _
          $region30: #{embedding_lookup.1} parent=27 // pred_check_branch
            %127 = sbr.rel (%p124) target = $region32
          $region31: #{embedding_lookup.1} parent=27 // pred_region
            %s142 = sand.u32 64, 7
            %p143 = scmp.eq.s32.totalorder %s142, 0
            // Predicated region
            $region44: #{embedding_lookup.1} parent=31 // pred_check
              %p144 = pneg %p143
            $region45: #{embedding_lookup.1} parent=31 // pred_check_branch
              %146 = sbr.rel (%p144) target = $region47
            $region46: #{embedding_lookup.1} parent=31 // pred_region
              loop: start=0, step=1, limit=1
              $region48: #{embedding_lookup.1} parent=46 // loop_pre_header
                _
              $region49: #{embedding_lookup.1} parent=46 // loop_header
                %s148 = sphi 0, %s152
                %p149 = scmp.ge.s32.totalorder %s148, 1
                %s153 = sphi %s1, %s1
                %s154 = sphi [#allocation2], [#allocation2]
              $region50: #{embedding_lookup.1} parent=46 // loop_header_branch
                %151 = sbr.rel (%p149) target = $region54
              $region51: #{embedding_lookup.1} parent=46 // loop_body
                %v155 = vld [vmem:[%s153] sm:$0xff]
                %156 = vst [vmem:[%s154] sm:$0xff] %v155
                %v157 = vld [vmem:[%s153 + $0x8] sm:$0xff]
                %158 = vst [vmem:[%s154 + $0x8] sm:$0xff] %v157
                %v159 = vld [vmem:[%s153 + $0x10] sm:$0xff]
                %160 = vst [vmem:[%s154 + $0x10] sm:$0xff] %v159
                %v161 = vld [vmem:[%s153 + $0x18] sm:$0xff]
                %162 = vst [vmem:[%s154 + $0x18] sm:$0xff] %v161
                %v163 = vld [vmem:[%s153 + $0x20] sm:$0xff]
                %164 = vst [vmem:[%s154 + $0x20] sm:$0xff] %v163
                %v165 = vld [vmem:[%s153 + $0x28] sm:$0xff]
                %166 = vst [vmem:[%s154 + $0x28] sm:$0xff] %v165
                %v167 = vld [vmem:[%s153 + $0x30] sm:$0xff]
                %168 = vst [vmem:[%s154 + $0x30] sm:$0xff] %v167
                %v169 = vld [vmem:[%s153 + $0x38] sm:$0xff]
                %170 = vst [vmem:[%s154 + $0x38] sm:$0xff] %v169
              $region52: #{embedding_lookup.1} parent=46 // loop_footer
                %s152 = sadd.s32 1, %s148
              $region53: #{embedding_lookup.1} parent=46 // loop_footer_branch
                %147 = sbr.rel target = $region49
              $region54: #{embedding_lookup.1} parent=46 // loop_exit
                _
            $region47: #{embedding_lookup.1} parent=31 // pred_fallthru
              _
            %p171 = pneg %p143
            // Predicated region
            $region55: #{embedding_lookup.1} parent=31 // pred_check
              _
            $region56: #{embedding_lookup.1} parent=31 // pred_check_branch
              %173 = sbr.rel (%p143) target = $region58
            $region57: #{embedding_lookup.1} parent=31 // pred_region
              %s174 = sand.u32 64, 7
            $region58: #{embedding_lookup.1} parent=31 // pred_fallthru
              _
          $region32: #{embedding_lookup.1} parent=27 // pred_fallthru
            _
          // Predicated region
          $region33: #{embedding_lookup.1} parent=27 // pred_check
            %p128 = pneg %p124
          $region34: #{embedding_lookup.1} parent=27 // pred_check_branch
            %130 = sbr.rel (%p128) target = $region36
          $region35: #{embedding_lookup.1} parent=27 // pred_region
            %s131 = sshllo.u32 0, 64
            loop: start=0, step=1, limit=1
            $region37: #{embedding_lookup.1} parent=35 // loop_pre_header
              _
            $region38: #{embedding_lookup.1} parent=35 // loop_header
              %s133 = sphi 0, %s137
              %p134 = scmp.ge.s32.totalorder %s133, 1
              %s138 = sphi %s1, %s1
              %s139 = sphi [#allocation2], [#allocation2]
            $region39: #{embedding_lookup.1} parent=35 // loop_header_branch
              %136 = sbr.rel (%p134) target = $region43
            $region40: #{embedding_lookup.1} parent=35 // loop_body
              %v140 = vld [vmem:[%s138] sm:%s131]
              %141 = vst [vmem:[%s139] sm:%s131] %v140
            $region41: #{embedding_lookup.1} parent=35 // loop_footer
              %s137 = sadd.s32 1, %s133
            $region42: #{embedding_lookup.1} parent=35 // loop_footer_branch
              %132 = sbr.rel target = $region38
            $region43: #{embedding_lookup.1} parent=35 // loop_exit
              _
          $region36: #{embedding_lookup.1} parent=27 // pred_fallthru
            _
          // Predicated region
          $region59: #{embedding_lookup.1} parent=27 // pred_check
            _
          $region60: #{embedding_lookup.1} parent=27 // pred_check_branch
            %177 = sbr.rel (0) target = $region62
          $region61: #{embedding_lookup.1} parent=27 // pred_region
            %178 = vsyncadd [#allocation4], 1024
          $region62: #{embedding_lookup.1} parent=27 // pred_fallthru
            _
          %v179 = vlaneseq
          %v180 = vand.u32 %v179, 127
          %vm181 = vcmask 523264
          %182 = vst.msk [vmem:[#allocation3] sm:$0xff] %vm181, %v180
          %183 = vst.msk [vmem:[#allocation3 + $0x8] sm:$0xff] %vm181, %v180
          %184 = vst.msk [vmem:[#allocation3 + $0x10] sm:$0xff] %vm181, %v180
          %185 = vst.msk [vmem:[#allocation3 + $0x18] sm:$0xff] %vm181, %v180
          %186 = vst.msk [vmem:[#allocation3 + $0x20] sm:$0xff] %vm181, %v180
          %187 = vst.msk [vmem:[#allocation3 + $0x28] sm:$0xff] %vm181, %v180
          %188 = vst.msk [vmem:[#allocation3 + $0x30] sm:$0xff] %vm181, %v180
          %189 = vst.msk [vmem:[#allocation3 + $0x38] sm:$0xff] %vm181, %v180
          %190 = vst.msk [vmem:[#allocation3 + $0x40] sm:$0xff] %vm181, %v180
          %191 = vst.msk [vmem:[#allocation3 + $0x48] sm:$0xff] %vm181, %v180
          %192 = vst.msk [vmem:[#allocation3 + $0x50] sm:$0xff] %vm181, %v180
          %193 = vst.msk [vmem:[#allocation3 + $0x58] sm:$0xff] %vm181, %v180
          %194 = vst.msk [vmem:[#allocation3 + $0x60] sm:$0xff] %vm181, %v180
          %195 = vst.msk [vmem:[#allocation3 + $0x68] sm:$0xff] %vm181, %v180
          %196 = vst.msk [vmem:[#allocation3 + $0x70] sm:$0xff] %vm181, %v180
          %197 = vst.msk [vmem:[#allocation3 + $0x78] sm:$0xff] %vm181, %v180
          %198 = vst.msk [vmem:[#allocation3 + $0x80] sm:$0xff] %vm181, %v180
          %199 = vst.msk [vmem:[#allocation3 + $0x88] sm:$0xff] %vm181, %v180
          %200 = vst.msk [vmem:[#allocation3 + $0x90] sm:$0xff] %vm181, %v180
          %201 = vst.msk [vmem:[#allocation3 + $0x98] sm:$0xff] %vm181, %v180
          %202 = vst.msk [vmem:[#allocation3 + $0xa0] sm:$0xff] %vm181, %v180
          %203 = vst.msk [vmem:[#allocation3 + $0xa8] sm:$0xff] %vm181, %v180
          %204 = vst.msk [vmem:[#allocation3 + $0xb0] sm:$0xff] %vm181, %v180
          %205 = vst.msk [vmem:[#allocation3 + $0xb8] sm:$0xff] %vm181, %v180
          %206 = vst.msk [vmem:[#allocation3 + $0xc0] sm:$0xff] %vm181, %v180
          %207 = vst.msk [vmem:[#allocation3 + $0xc8] sm:$0xff] %vm181, %v180
          %208 = vst.msk [vmem:[#allocation3 + $0xd0] sm:$0xff] %vm181, %v180
          %209 = vst.msk [vmem:[#allocation3 + $0xd8] sm:$0xff] %vm181, %v180
          %210 = vst.msk [vmem:[#allocation3 + $0xe0] sm:$0xff] %vm181, %v180
          %211 = vst.msk [vmem:[#allocation3 + $0xe8] sm:$0xff] %vm181, %v180
          %212 = vst.msk [vmem:[#allocation3 + $0xf0] sm:$0xff] %vm181, %v180
          %213 = vst.msk [vmem:[#allocation3 + $0xf8] sm:$0xff] %vm181, %v180
        $region28: #{embedding_lookup.1} parent=23 // pred_fallthru
          _
        %v214 = vld [vmem:[%s116] sm:$0xff]
        %v215 = vld [vmem:[%s116 + $0x8] sm:$0xff]
        %v216 = vld [vmem:[%s116 + $0x10] sm:$0xff]
        %v217 = vld [vmem:[%s116 + $0x18] sm:$0xff]
        %v218 = vld [vmem:[%s116 + $0x20] sm:$0xff]
        %v219 = vld [vmem:[%s116 + $0x28] sm:$0xff]
        %v220 = vld [vmem:[%s116 + $0x30] sm:$0xff]
        %v221 = vld [vmem:[%s116 + $0x38] sm:$0xff]
        %v222 = vld [vmem:[%s116 + $0x40] sm:$0xff]
        %v223 = vld [vmem:[%s116 + $0x48] sm:$0xff]
        %v224 = vld [vmem:[%s116 + $0x50] sm:$0xff]
        %v225 = vld [vmem:[%s116 + $0x58] sm:$0xff]
        %v226 = vld [vmem:[%s116 + $0x60] sm:$0xff]
        %v227 = vld [vmem:[%s116 + $0x68] sm:$0xff]
        %v228 = vld [vmem:[%s116 + $0x70] sm:$0xff]
        %v229 = vld [vmem:[%s116 + $0x78] sm:$0xff]
        %v230 = vld [vmem:[%s116 + $0x80] sm:$0xff]
        %v231 = vld [vmem:[%s116 + $0x88] sm:$0xff]
        %v232 = vld [vmem:[%s116 + $0x90] sm:$0xff]
        %v233 = vld [vmem:[%s116 + $0x98] sm:$0xff]
        %v234 = vld [vmem:[%s116 + $0xa0] sm:$0xff]
        %v235 = vld [vmem:[%s116 + $0xa8] sm:$0xff]
        %v236 = vld [vmem:[%s116 + $0xb0] sm:$0xff]
        %v237 = vld [vmem:[%s116 + $0xb8] sm:$0xff]
        %v238 = vld [vmem:[%s116 + $0xc0] sm:$0xff]
        %v239 = vld [vmem:[%s116 + $0xc8] sm:$0xff]
        %v240 = vld [vmem:[%s116 + $0xd0] sm:$0xff]
        %v241 = vld [vmem:[%s116 + $0xd8] sm:$0xff]
        %v242 = vld [vmem:[%s116 + $0xe0] sm:$0xff]
        %v243 = vld [vmem:[%s116 + $0xe8] sm:$0xff]
        %v244 = vld [vmem:[%s116 + $0xf0] sm:$0xff]
        %v245 = vld [vmem:[%s116 + $0xf8] sm:$0xff]
        %v246 = vld [vmem:[#allocation3] sm:$0xff]
        %v247 = vld [vmem:[#allocation3 + $0x8] sm:$0xff]
        %v248 = vld [vmem:[#allocation3 + $0x10] sm:$0xff]
        %v249 = vld [vmem:[#allocation3 + $0x18] sm:$0xff]
        %v250 = vld [vmem:[#allocation3 + $0x20] sm:$0xff]
        %v251 = vld [vmem:[#allocation3 + $0x28] sm:$0xff]
        %v252 = vld [vmem:[#allocation3 + $0x30] sm:$0xff]
        %v253 = vld [vmem:[#allocation3 + $0x38] sm:$0xff]
        %v254 = vld [vmem:[#allocation3 + $0x40] sm:$0xff]
        %v255 = vld [vmem:[#allocation3 + $0x48] sm:$0xff]
        %v256 = vld [vmem:[#allocation3 + $0x50] sm:$0xff]
        %v257 = vld [vmem:[#allocation3 + $0x58] sm:$0xff]
        %v258 = vld [vmem:[#allocation3 + $0x60] sm:$0xff]
        %v259 = vld [vmem:[#allocation3 + $0x68] sm:$0xff]
        %v260 = vld [vmem:[#allocation3 + $0x70] sm:$0xff]
        %v261 = vld [vmem:[#allocation3 + $0x78] sm:$0xff]
        %v262 = vld [vmem:[#allocation3 + $0x80] sm:$0xff]
        %v263 = vld [vmem:[#allocation3 + $0x88] sm:$0xff]
        %v264 = vld [vmem:[#allocation3 + $0x90] sm:$0xff]
        %v265 = vld [vmem:[#allocation3 + $0x98] sm:$0xff]
        %v266 = vld [vmem:[#allocation3 + $0xa0] sm:$0xff]
        %v267 = vld [vmem:[#allocation3 + $0xa8] sm:$0xff]
        %v268 = vld [vmem:[#allocation3 + $0xb0] sm:$0xff]
        %v269 = vld [vmem:[#allocation3 + $0xb8] sm:$0xff]
        %v270 = vld [vmem:[#allocation3 + $0xc0] sm:$0xff]
        %v271 = vld [vmem:[#allocation3 + $0xc8] sm:$0xff]
        %v272 = vld [vmem:[#allocation3 + $0xd0] sm:$0xff]
        %v273 = vld [vmem:[#allocation3 + $0xd8] sm:$0xff]
        %v274 = vld [vmem:[#allocation3 + $0xe0] sm:$0xff]
        %v275 = vld [vmem:[#allocation3 + $0xe8] sm:$0xff]
        %v276 = vld [vmem:[#allocation3 + $0xf0] sm:$0xff]
        %v277 = vld [vmem:[#allocation3 + $0xf8] sm:$0xff]
        %278 = vset.pattern.permute.xlu0 0
        %279 = vperm.xlu0 %278, %v214
        %v280 = vpop.permute.xlu0 %279
        %281 = vset.pattern.permute.xlu0 0
        %282 = vperm.xlu0 %281, %v215
        %v283 = vpop.permute.xlu0 %282
        %284 = vset.pattern.permute.xlu0 0
        %285 = vperm.xlu0 %284, %v216
        %v286 = vpop.permute.xlu0 %285
        %287 = vset.pattern.permute.xlu0 0
        %288 = vperm.xlu0 %287, %v217
        %v289 = vpop.permute.xlu0 %288
        %290 = vset.pattern.permute.xlu0 0
        %291 = vperm.xlu0 %290, %v218
        %v292 = vpop.permute.xlu0 %291
        %293 = vset.pattern.permute.xlu0 0
        %294 = vperm.xlu0 %293, %v219
        %v295 = vpop.permute.xlu0 %294
        %296 = vset.pattern.permute.xlu0 0
        %297 = vperm.xlu0 %296, %v220
        %v298 = vpop.permute.xlu0 %297
        %299 = vset.pattern.permute.xlu0 0
        %300 = vperm.xlu0 %299, %v221
        %v301 = vpop.permute.xlu0 %300
        %302 = vset.pattern.permute.xlu0 0
        %303 = vperm.xlu0 %302, %v222
        %v304 = vpop.permute.xlu0 %303
        %305 = vset.pattern.permute.xlu0 0
        %306 = vperm.xlu0 %305, %v223
        %v307 = vpop.permute.xlu0 %306
        %308 = vset.pattern.permute.xlu0 0
        %309 = vperm.xlu0 %308, %v224
        %v310 = vpop.permute.xlu0 %309
        %311 = vset.pattern.permute.xlu0 0
        %312 = vperm.xlu0 %311, %v225
        %v313 = vpop.permute.xlu0 %312
        %314 = vset.pattern.permute.xlu0 0
        %315 = vperm.xlu0 %314, %v226
        %v316 = vpop.permute.xlu0 %315
        %317 = vset.pattern.permute.xlu0 0
        %318 = vperm.xlu0 %317, %v227
        %v319 = vpop.permute.xlu0 %318
        %320 = vset.pattern.permute.xlu0 0
        %321 = vperm.xlu0 %320, %v228
        %v322 = vpop.permute.xlu0 %321
        %323 = vset.pattern.permute.xlu0 0
        %324 = vperm.xlu0 %323, %v229
        %v325 = vpop.permute.xlu0 %324
        %326 = vset.pattern.permute.xlu0 0
        %327 = vperm.xlu0 %326, %v230
        %v328 = vpop.permute.xlu0 %327
        %329 = vset.pattern.permute.xlu0 0
        %330 = vperm.xlu0 %329, %v231
        %v331 = vpop.permute.xlu0 %330
        %332 = vset.pattern.permute.xlu0 0
        %333 = vperm.xlu0 %332, %v232
        %v334 = vpop.permute.xlu0 %333
        %335 = vset.pattern.permute.xlu0 0
        %336 = vperm.xlu0 %335, %v233
        %v337 = vpop.permute.xlu0 %336
        %338 = vset.pattern.permute.xlu0 0
        %339 = vperm.xlu0 %338, %v234
        %v340 = vpop.permute.xlu0 %339
        %341 = vset.pattern.permute.xlu0 0
        %342 = vperm.xlu0 %341, %v235
        %v343 = vpop.permute.xlu0 %342
        %344 = vset.pattern.permute.xlu0 0
        %345 = vperm.xlu0 %344, %v236
        %v346 = vpop.permute.xlu0 %345
        %347 = vset.pattern.permute.xlu0 0
        %348 = vperm.xlu0 %347, %v237
        %v349 = vpop.permute.xlu0 %348
        %350 = vset.pattern.permute.xlu0 0
        %351 = vperm.xlu0 %350, %v238
        %v352 = vpop.permute.xlu0 %351
        %353 = vset.pattern.permute.xlu0 0
        %354 = vperm.xlu0 %353, %v239
        %v355 = vpop.permute.xlu0 %354
        %356 = vset.pattern.permute.xlu0 0
        %357 = vperm.xlu0 %356, %v240
        %v358 = vpop.permute.xlu0 %357
        %359 = vset.pattern.permute.xlu0 0
        %360 = vperm.xlu0 %359, %v241
        %v361 = vpop.permute.xlu0 %360
        %362 = vset.pattern.permute.xlu0 0
        %363 = vperm.xlu0 %362, %v242
        %v364 = vpop.permute.xlu0 %363
        %365 = vset.pattern.permute.xlu0 0
        %366 = vperm.xlu0 %365, %v243
        %v367 = vpop.permute.xlu0 %366
        %368 = vset.pattern.permute.xlu0 0
        %369 = vperm.xlu0 %368, %v244
        %v370 = vpop.permute.xlu0 %369
        %371 = vset.pattern.permute.xlu0 0
        %372 = vperm.xlu0 %371, %v245
        %v373 = vpop.permute.xlu0 %372
        %vm374 = vcmp.eq.s32.totalorder %v280, %v246
        %vm375 = vcmp.eq.s32.totalorder %v283, %v247
        %vm376 = vcmp.eq.s32.totalorder %v286, %v248
        %vm377 = vcmp.eq.s32.totalorder %v289, %v249
        %vm378 = vcmp.eq.s32.totalorder %v292, %v250
        %vm379 = vcmp.eq.s32.totalorder %v295, %v251
        %vm380 = vcmp.eq.s32.totalorder %v298, %v252
        %vm381 = vcmp.eq.s32.totalorder %v301, %v253
        %vm382 = vcmp.eq.s32.totalorder %v304, %v254
        %vm383 = vcmp.eq.s32.totalorder %v307, %v255
        %vm384 = vcmp.eq.s32.totalorder %v310, %v256
        %vm385 = vcmp.eq.s32.totalorder %v313, %v257
        %vm386 = vcmp.eq.s32.totalorder %v316, %v258
        %vm387 = vcmp.eq.s32.totalorder %v319, %v259
        %vm388 = vcmp.eq.s32.totalorder %v322, %v260
        %vm389 = vcmp.eq.s32.totalorder %v325, %v261
        %vm390 = vcmp.eq.s32.totalorder %v328, %v262
        %vm391 = vcmp.eq.s32.totalorder %v331, %v263
        %vm392 = vcmp.eq.s32.totalorder %v334, %v264
        %vm393 = vcmp.eq.s32.totalorder %v337, %v265
        %vm394 = vcmp.eq.s32.totalorder %v340, %v266
        %vm395 = vcmp.eq.s32.totalorder %v343, %v267
        %vm396 = vcmp.eq.s32.totalorder %v346, %v268
        %vm397 = vcmp.eq.s32.totalorder %v349, %v269
        %vm398 = vcmp.eq.s32.totalorder %v352, %v270
        %vm399 = vcmp.eq.s32.totalorder %v355, %v271
        %vm400 = vcmp.eq.s32.totalorder %v358, %v272
        %vm401 = vcmp.eq.s32.totalorder %v361, %v273
        %vm402 = vcmp.eq.s32.totalorder %v364, %v274
        %vm403 = vcmp.eq.s32.totalorder %v367, %v275
        %vm404 = vcmp.eq.s32.totalorder %v370, %v276
        %vm405 = vcmp.eq.s32.totalorder %v373, %v277
        %v406 = vsel %vm374, 1, 0
        %v407 = vsel %vm375, 1, 0
        %v408 = vsel %vm376, 1, 0
        %v409 = vsel %vm377, 1, 0
        %v410 = vsel %vm378, 1, 0
        %v411 = vsel %vm379, 1, 0
        %v412 = vsel %vm380, 1, 0
        %v413 = vsel %vm381, 1, 0
        %v414 = vsel %vm382, 1, 0
        %v415 = vsel %vm383, 1, 0
        %v416 = vsel %vm384, 1, 0
        %v417 = vsel %vm385, 1, 0
        %v418 = vsel %vm386, 1, 0
        %v419 = vsel %vm387, 1, 0
        %v420 = vsel %vm388, 1, 0
        %v421 = vsel %vm389, 1, 0
        %v422 = vsel %vm390, 1, 0
        %v423 = vsel %vm391, 1, 0
        %v424 = vsel %vm392, 1, 0
        %v425 = vsel %vm393, 1, 0
        %v426 = vsel %vm394, 1, 0
        %v427 = vsel %vm395, 1, 0
        %v428 = vsel %vm396, 1, 0
        %v429 = vsel %vm397, 1, 0
        %v430 = vsel %vm398, 1, 0
        %v431 = vsel %vm399, 1, 0
        %v432 = vsel %vm400, 1, 0
        %v433 = vsel %vm401, 1, 0
        %v434 = vsel %vm402, 1, 0
        %v435 = vsel %vm403, 1, 0
        %v436 = vsel %vm404, 1, 0
        %v437 = vsel %vm405, 1, 0
        %v438 = vcvt.s32.f32 %v406
        %v439 = vcvt.s32.f32 %v407
        %v440 = vcvt.s32.f32 %v408
        %v441 = vcvt.s32.f32 %v409
        %v442 = vcvt.s32.f32 %v410
        %v443 = vcvt.s32.f32 %v411
        %v444 = vcvt.s32.f32 %v412
        %v445 = vcvt.s32.f32 %v413
        %v446 = vcvt.s32.f32 %v414
        %v447 = vcvt.s32.f32 %v415
        %v448 = vcvt.s32.f32 %v416
        %v449 = vcvt.s32.f32 %v417
        %v450 = vcvt.s32.f32 %v418
        %v451 = vcvt.s32.f32 %v419
        %v452 = vcvt.s32.f32 %v420
        %v453 = vcvt.s32.f32 %v421
        %v454 = vcvt.s32.f32 %v422
        %v455 = vcvt.s32.f32 %v423
        %v456 = vcvt.s32.f32 %v424
        %v457 = vcvt.s32.f32 %v425
        %v458 = vcvt.s32.f32 %v426
        %v459 = vcvt.s32.f32 %v427
        %v460 = vcvt.s32.f32 %v428
        %v461 = vcvt.s32.f32 %v429
        %v462 = vcvt.s32.f32 %v430
        %v463 = vcvt.s32.f32 %v431
        %v464 = vcvt.s32.f32 %v432
        %v465 = vcvt.s32.f32 %v433
        %v466 = vcvt.s32.f32 %v434
        %v467 = vcvt.s32.f32 %v435
        %v468 = vcvt.s32.f32 %v436
        %v469 = vcvt.s32.f32 %v437
        // Predicated region
        $region63: #{embedding_lookup.1} parent=23 // pred_check
          %p470 = pneg %p119
        $region64: #{embedding_lookup.1} parent=23 // pred_check_branch
          %472 = sbr.rel (%p470) target = $region66
        $region65: #{embedding_lookup.1} parent=23 // pred_region
          %s473 = smul.u32 64, 1
          %s474 = sshll.u32 %s473, 4
          %475 = dma.done [#allocation4], %s474
        $region66: #{embedding_lookup.1} parent=23 // pred_fallthru
          _
        %v476 = vld [vmem:[#allocation2] sm:$0xff]
        %v477 = vld [vmem:[#allocation2 + $0x8] sm:$0xff]
        %v478 = vld [vmem:[#allocation2 + $0x10] sm:$0xff]
        %v479 = vld [vmem:[#allocation2 + $0x18] sm:$0xff]
        %v480 = vld [vmem:[#allocation2 + $0x20] sm:$0xff]
        %v481 = vld [vmem:[#allocation2 + $0x28] sm:$0xff]
        %v482 = vld [vmem:[#allocation2 + $0x30] sm:$0xff]
        %v483 = vld [vmem:[#allocation2 + $0x38] sm:$0xff]
        %vm484 = vcmask 523264
        %v486 = vsel %vm484, %v438, 0
        %v489 = vsel %vm484, %v439, 0
        %v492 = vsel %vm484, %v440, 0
        %v495 = vsel %vm484, %v441, 0
        %v498 = vsel %vm484, %v442, 0
        %v501 = vsel %vm484, %v443, 0
        %v504 = vsel %vm484, %v444, 0
        %v507 = vsel %vm484, %v445, 0
        %v510 = vsel %vm484, %v446, 0
        %v513 = vsel %vm484, %v447, 0
        %v516 = vsel %vm484, %v448, 0
        %v519 = vsel %vm484, %v449, 0
        %v522 = vsel %vm484, %v450, 0
        %v525 = vsel %vm484, %v451, 0
        %v528 = vsel %vm484, %v452, 0
        %v531 = vsel %vm484, %v453, 0
        %v534 = vsel %vm484, %v454, 0
        %v537 = vsel %vm484, %v455, 0
        %v540 = vsel %vm484, %v456, 0
        %v543 = vsel %vm484, %v457, 0
        %v546 = vsel %vm484, %v458, 0
        %v549 = vsel %vm484, %v459, 0
        %v552 = vsel %vm484, %v460, 0
        %v555 = vsel %vm484, %v461, 0
        %v558 = vsel %vm484, %v462, 0
        %v561 = vsel %vm484, %v463, 0
        %v564 = vsel %vm484, %v464, 0
        %v567 = vsel %vm484, %v465, 0
        %v570 = vsel %vm484, %v466, 0
        %v573 = vsel %vm484, %v467, 0
        %v576 = vsel %vm484, %v468, 0
        %v579 = vsel %vm484, %v469, 0
        %581 = vmatprep.subr.mxu0 0.0
        %582 = vmatpush1.msra.mxu0 %v476
        %583 = vmatprep.subr.mxu0 0.0
        %584 = vmatpush1.msra.mxu0 %v477
        %585 = vmatprep.subr.mxu0 0.0
        %586 = vmatpush1.msra.mxu0 %v478
        %587 = vmatprep.subr.mxu0 0.0
        %588 = vmatpush1.msra.mxu0 %v479
        %589 = vmatprep.subr.mxu0 0.0
        %590 = vmatpush1.msra.mxu0 %v480
        %591 = vmatprep.subr.mxu0 0.0
        %592 = vmatpush1.msra.mxu0 %v481
        %593 = vmatprep.subr.mxu0 0.0
        %594 = vmatpush1.msra.mxu0 %v482
        %595 = vmatprep.subr.mxu0 0.0
        %596 = vmatpush1.msra.mxu0 %v483
        %597 = vmatprep.subr.mxu0 0.0
        %598 = vmatpush1.msra.mxu0 0.0
        %599 = vmatprep.subr.mxu0 0.0
        %600 = vmatpush1.msra.mxu0 0.0
        %601 = vmatprep.subr.mxu0 0.0
        %602 = vmatpush1.msra.mxu0 0.0
        %603 = vmatprep.subr.mxu0 0.0
        %604 = vmatpush1.msra.mxu0 0.0
        %605 = vmatprep.subr.mxu0 0.0
        %606 = vmatpush1.msra.mxu0 0.0
        %607 = vmatprep.subr.mxu0 0.0
        %608 = vmatpush1.msra.mxu0 0.0
        %609 = vmatprep.subr.mxu0 0.0
        %610 = vmatpush1.msra.mxu0 0.0
        %611 = vmatprep.subr.mxu0 0.0
        %612 = vmatpush1.msra.mxu0 0.0
        %613 = vmatprep.subr.mxu0 0.0
        %614 = vmatpush1.msra.mxu0 0.0
        %615 = vmatprep.subr.mxu0 0.0
        %616 = vmatpush1.msra.mxu0 0.0
        %617 = vmatprep.subr.mxu0 0.0
        %618 = vmatpush1.msra.mxu0 0.0
        %619 = vmatprep.subr.mxu0 0.0
        %620 = vmatpush1.msra.mxu0 0.0
        %621 = vmatprep.subr.mxu0 0.0
        %622 = vmatpush1.msra.mxu0 0.0
        %623 = vmatprep.subr.mxu0 0.0
        %624 = vmatpush1.msra.mxu0 0.0
        %625 = vmatprep.subr.mxu0 0.0
        %626 = vmatpush1.msra.mxu0 0.0
        %627 = vmatprep.subr.mxu0 0.0
        %628 = vmatpush1.msra.mxu0 0.0
        %629 = vmatprep.subr.mxu0 0.0
        %630 = vmatpush1.msra.mxu0 0.0
        %631 = vmatprep.subr.mxu0 0.0
        %632 = vmatpush1.msra.mxu0 0.0
        %633 = vmatprep.subr.mxu0 0.0
        %634 = vmatpush1.msra.mxu0 0.0
        %635 = vmatprep.subr.mxu0 0.0
        %636 = vmatpush1.msra.mxu0 0.0
        %637 = vmatprep.subr.mxu0 0.0
        %638 = vmatpush1.msra.mxu0 0.0
        %639 = vmatprep.subr.mxu0 0.0
        %640 = vmatpush1.msra.mxu0 0.0
        %641 = vmatprep.subr.mxu0 0.0
        %642 = vmatpush1.msra.mxu0 0.0
        %643 = vmatprep.subr.mxu0 0.0
        %644 = vmatpush1.msra.mxu0 0.0
        %645 = vmatprep.mubr.f32.mxu0 0.0
        %646 = vmatmul.mubr.f32.gmra.mrb[0].mxu0 %v486
        %v647 = vpop.f32.mrb[0].mxu0
        %v648 = vadd.f32 0.0, %v647
        %v649 = vpop.f32.mrb[0].mxu0
        %650 = vmatprep.mubr.f32.mxu0 0.0
        %651 = vmatmul.mubr.f32.gmra.mrb[0].mxu0 %v489
        %v652 = vpop.f32.mrb[0].mxu0
        %v653 = vadd.f32 0.0, %v652
        %v654 = vpop.f32.mrb[0].mxu0
        %655 = vmatprep.mubr.f32.mxu0 0.0
        %656 = vmatmul.mubr.f32.gmra.mrb[0].mxu0 %v492
        %v657 = vpop.f32.mrb[0].mxu0
        %v658 = vadd.f32 0.0, %v657
        %v659 = vpop.f32.mrb[0].mxu0
        %660 = vmatprep.mubr.f32.mxu0 0.0
        %661 = vmatmul.mubr.f32.gmra.mrb[0].mxu0 %v495
        %v662 = vpop.f32.mrb[0].mxu0
        %v663 = vadd.f32 0.0, %v662
        %v664 = vpop.f32.mrb[0].mxu0
        %665 = vmatprep.mubr.f32.mxu0 0.0
        %666 = vmatmul.mubr.f32.gmra.mrb[0].mxu0 %v498
        %v667 = vpop.f32.mrb[0].mxu0
        %v668 = vadd.f32 0.0, %v667
        %v669 = vpop.f32.mrb[0].mxu0
        %670 = vmatprep.mubr.f32.mxu0 0.0
        %671 = vmatmul.mubr.f32.gmra.mrb[0].mxu0 %v501
        %v672 = vpop.f32.mrb[0].mxu0
        %v673 = vadd.f32 0.0, %v672
        %v674 = vpop.f32.mrb[0].mxu0
        %675 = vmatprep.mubr.f32.mxu0 0.0
        %676 = vmatmul.mubr.f32.gmra.mrb[0].mxu0 %v504
        %v677 = vpop.f32.mrb[0].mxu0
        %v678 = vadd.f32 0.0, %v677
        %v679 = vpop.f32.mrb[0].mxu0
        %680 = vmatprep.mubr.f32.mxu0 0.0
        %681 = vmatmul.mubr.f32.gmra.mrb[0].mxu0 %v507
        %v682 = vpop.f32.mrb[0].mxu0
        %v683 = vadd.f32 0.0, %v682
        %v684 = vpop.f32.mrb[0].mxu0
        %685 = vmatprep.mubr.f32.mxu0 0.0
        %686 = vmatmul.mubr.f32.gmra.mrb[0].mxu0 %v510
        %v687 = vpop.f32.mrb[0].mxu0
        %v688 = vadd.f32 0.0, %v687
        %v689 = vpop.f32.mrb[0].mxu0
        %690 = vmatprep.mubr.f32.mxu0 0.0
        %691 = vmatmul.mubr.f32.gmra.mrb[0].mxu0 %v513
        %v692 = vpop.f32.mrb[0].mxu0
        %v693 = vadd.f32 0.0, %v692
        %v694 = vpop.f32.mrb[0].mxu0
        %695 = vmatprep.mubr.f32.mxu0 0.0
        %696 = vmatmul.mubr.f32.gmra.mrb[0].mxu0 %v516
        %v697 = vpop.f32.mrb[0].mxu0
        %v698 = vadd.f32 0.0, %v697
        %v699 = vpop.f32.mrb[0].mxu0
        %700 = vmatprep.mubr.f32.mxu0 0.0
        %701 = vmatmul.mubr.f32.gmra.mrb[0].mxu0 %v519
        %v702 = vpop.f32.mrb[0].mxu0
        %v703 = vadd.f32 0.0, %v702
        %v704 = vpop.f32.mrb[0].mxu0
        %705 = vmatprep.mubr.f32.mxu0 0.0
        %706 = vmatmul.mubr.f32.gmra.mrb[0].mxu0 %v522
        %v707 = vpop.f32.mrb[0].mxu0
        %v708 = vadd.f32 0.0, %v707
        %v709 = vpop.f32.mrb[0].mxu0
        %710 = vmatprep.mubr.f32.mxu0 0.0
        %711 = vmatmul.mubr.f32.gmra.mrb[0].mxu0 %v525
        %v712 = vpop.f32.mrb[0].mxu0
        %v713 = vadd.f32 0.0, %v712
        %v714 = vpop.f32.mrb[0].mxu0
        %715 = vmatprep.mubr.f32.mxu0 0.0
        %716 = vmatmul.mubr.f32.gmra.mrb[0].mxu0 %v528
        %v717 = vpop.f32.mrb[0].mxu0
        %v718 = vadd.f32 0.0, %v717
        %v719 = vpop.f32.mrb[0].mxu0
        %720 = vmatprep.mubr.f32.mxu0 0.0
        %721 = vmatmul.mubr.f32.gmra.mrb[0].mxu0 %v531
        %v722 = vpop.f32.mrb[0].mxu0
        %v723 = vadd.f32 0.0, %v722
        %v724 = vpop.f32.mrb[0].mxu0
        %725 = vmatprep.mubr.f32.mxu0 0.0
        %726 = vmatmul.mubr.f32.gmra.mrb[0].mxu0 %v534
        %v727 = vpop.f32.mrb[0].mxu0
        %v728 = vadd.f32 0.0, %v727
        %v729 = vpop.f32.mrb[0].mxu0
        %730 = vmatprep.mubr.f32.mxu0 0.0
        %731 = vmatmul.mubr.f32.gmra.mrb[0].mxu0 %v537
        %v732 = vpop.f32.mrb[0].mxu0
        %v733 = vadd.f32 0.0, %v732
        %v734 = vpop.f32.mrb[0].mxu0
        %735 = vmatprep.mubr.f32.mxu0 0.0
        %736 = vmatmul.mubr.f32.gmra.mrb[0].mxu0 %v540
        %v737 = vpop.f32.mrb[0].mxu0
        %v738 = vadd.f32 0.0, %v737
        %v739 = vpop.f32.mrb[0].mxu0
        %740 = vmatprep.mubr.f32.mxu0 0.0
        %741 = vmatmul.mubr.f32.gmra.mrb[0].mxu0 %v543
        %v742 = vpop.f32.mrb[0].mxu0
        %v743 = vadd.f32 0.0, %v742
        %v744 = vpop.f32.mrb[0].mxu0
        %745 = vmatprep.mubr.f32.mxu0 0.0
        %746 = vmatmul.mubr.f32.gmra.mrb[0].mxu0 %v546
        %v747 = vpop.f32.mrb[0].mxu0
        %v748 = vadd.f32 0.0, %v747
        %v749 = vpop.f32.mrb[0].mxu0
        %750 = vmatprep.mubr.f32.mxu0 0.0
        %751 = vmatmul.mubr.f32.gmra.mrb[0].mxu0 %v549
        %v752 = vpop.f32.mrb[0].mxu0
        %v753 = vadd.f32 0.0, %v752
        %v754 = vpop.f32.mrb[0].mxu0
        %755 = vmatprep.mubr.f32.mxu0 0.0
        %756 = vmatmul.mubr.f32.gmra.mrb[0].mxu0 %v552
        %v757 = vpop.f32.mrb[0].mxu0
        %v758 = vadd.f32 0.0, %v757
        %v759 = vpop.f32.mrb[0].mxu0
        %760 = vmatprep.mubr.f32.mxu0 0.0
        %761 = vmatmul.mubr.f32.gmra.mrb[0].mxu0 %v555
        %v762 = vpop.f32.mrb[0].mxu0
        %v763 = vadd.f32 0.0, %v762
        %v764 = vpop.f32.mrb[0].mxu0
        %765 = vmatprep.mubr.f32.mxu0 0.0
        %766 = vmatmul.mubr.f32.gmra.mrb[0].mxu0 %v558
        %v767 = vpop.f32.mrb[0].mxu0
        %v768 = vadd.f32 0.0, %v767
        %v769 = vpop.f32.mrb[0].mxu0
        %770 = vmatprep.mubr.f32.mxu0 0.0
        %771 = vmatmul.mubr.f32.gmra.mrb[0].mxu0 %v561
        %v772 = vpop.f32.mrb[0].mxu0
        %v773 = vadd.f32 0.0, %v772
        %v774 = vpop.f32.mrb[0].mxu0
        %775 = vmatprep.mubr.f32.mxu0 0.0
        %776 = vmatmul.mubr.f32.gmra.mrb[0].mxu0 %v564
        %v777 = vpop.f32.mrb[0].mxu0
        %v778 = vadd.f32 0.0, %v777
        %v779 = vpop.f32.mrb[0].mxu0
        %780 = vmatprep.mubr.f32.mxu0 0.0
        %781 = vmatmul.mubr.f32.gmra.mrb[0].mxu0 %v567
        %v782 = vpop.f32.mrb[0].mxu0
        %v783 = vadd.f32 0.0, %v782
        %v784 = vpop.f32.mrb[0].mxu0
        %785 = vmatprep.mubr.f32.mxu0 0.0
        %786 = vmatmul.mubr.f32.gmra.mrb[0].mxu0 %v570
        %v787 = vpop.f32.mrb[0].mxu0
        %v788 = vadd.f32 0.0, %v787
        %v789 = vpop.f32.mrb[0].mxu0
        %790 = vmatprep.mubr.f32.mxu0 0.0
        %791 = vmatmul.mubr.f32.gmra.mrb[0].mxu0 %v573
        %v792 = vpop.f32.mrb[0].mxu0
        %v793 = vadd.f32 0.0, %v792
        %v794 = vpop.f32.mrb[0].mxu0
        %795 = vmatprep.mubr.f32.mxu0 0.0
        %796 = vmatmul.mubr.f32.gmra.mrb[0].mxu0 %v576
        %v797 = vpop.f32.mrb[0].mxu0
        %v798 = vadd.f32 0.0, %v797
        %v799 = vpop.f32.mrb[0].mxu0
        %800 = vmatprep.mubr.f32.mxu0 0.0
        %801 = vmatmul.mubr.f32.gmra.mrb[0].mxu0 %v579
        %v802 = vpop.f32.mrb[0].mxu0
        %v803 = vadd.f32 0.0, %v802
        %v804 = vpop.f32.mrb[0].mxu0
        %805 = vdwg.mxu0
        %806 = vst [vmem:[%s111] sm:$0xff] %v648
        %807 = vst [vmem:[%s111 + $0x8] sm:$0xff] %v653
        %808 = vst [vmem:[%s111 + $0x10] sm:$0xff] %v658
        %809 = vst [vmem:[%s111 + $0x18] sm:$0xff] %v663
        %810 = vst [vmem:[%s111 + $0x20] sm:$0xff] %v668
        %811 = vst [vmem:[%s111 + $0x28] sm:$0xff] %v673
        %812 = vst [vmem:[%s111 + $0x30] sm:$0xff] %v678
        %813 = vst [vmem:[%s111 + $0x38] sm:$0xff] %v683
        %814 = vst [vmem:[%s111 + $0x40] sm:$0xff] %v688
        %815 = vst [vmem:[%s111 + $0x48] sm:$0xff] %v693
        %816 = vst [vmem:[%s111 + $0x50] sm:$0xff] %v698
        %817 = vst [vmem:[%s111 + $0x58] sm:$0xff] %v703
        %818 = vst [vmem:[%s111 + $0x60] sm:$0xff] %v708
        %819 = vst [vmem:[%s111 + $0x68] sm:$0xff] %v713
        %820 = vst [vmem:[%s111 + $0x70] sm:$0xff] %v718
        %821 = vst [vmem:[%s111 + $0x78] sm:$0xff] %v723
        %822 = vst [vmem:[%s111 + $0x80] sm:$0xff] %v728
        %823 = vst [vmem:[%s111 + $0x88] sm:$0xff] %v733
        %824 = vst [vmem:[%s111 + $0x90] sm:$0xff] %v738
        %825 = vst [vmem:[%s111 + $0x98] sm:$0xff] %v743
        %826 = vst [vmem:[%s111 + $0xa0] sm:$0xff] %v748
        %827 = vst [vmem:[%s111 + $0xa8] sm:$0xff] %v753
        %828 = vst [vmem:[%s111 + $0xb0] sm:$0xff] %v758
        %829 = vst [vmem:[%s111 + $0xb8] sm:$0xff] %v763
        %830 = vst [vmem:[%s111 + $0xc0] sm:$0xff] %v768
        %831 = vst [vmem:[%s111 + $0xc8] sm:$0xff] %v773
        %832 = vst [vmem:[%s111 + $0xd0] sm:$0xff] %v778
        %833 = vst [vmem:[%s111 + $0xd8] sm:$0xff] %v783
        %834 = vst [vmem:[%s111 + $0xe0] sm:$0xff] %v788
        %835 = vst [vmem:[%s111 + $0xe8] sm:$0xff] %v793
        %836 = vst [vmem:[%s111 + $0xf0] sm:$0xff] %v798
        %837 = vst [vmem:[%s111 + $0xf8] sm:$0xff] %v803
        %s838 = sand.u32 %s50, 1
        %s839 = scalar_lea.sflag [#allocation6], %s838
        %s840 = sand.u32 %s50, 1
        %s841 = smul.addr %s840, 256
        %s842 = scalar_lea.vmem [#allocation5], %s841
        // Predicated region
        $region67: #{embedding_lookup.1} parent=23 // pred_check
          %p843 = pneg %p60
        $region68: #{embedding_lookup.1} parent=23 // pred_check_branch
          %845 = sbr.rel (%p843) target = $region70
        $region69: #{embedding_lookup.1} parent=23 // pred_region
          %s846 = smul.u32 32, %s16
          %s848 = ssub.s32 4096, 4096
          %849 = vsyncadd %s839, %s848
          %s850 = smul.addr %s846, 128
          %s851 = scalar_lea.hbm %s2, %s850
          %s852 = sshll.u32 %s842, 4
          %s853 = int_to_ptr.vmem [resolvable:$true] %s852
          %858 = dma.vmem_to_hbm [thread:$0]  %s853, 4096, %s851, %s839, 128, 128, 8
        $region70: #{embedding_lookup.1} parent=23 // pred_fallthru
          _
      $region24: #{embedding_lookup.1} parent=5 // pred_fallthru
        _
      %p859 = scmp.le.s32.totalorder 2, %s11
      // Predicated region
      $region71: #{embedding_lookup.1} parent=5 // pred_check
        %p860 = pneg %p859
      $region72: #{embedding_lookup.1} parent=5 // pred_check_branch
        %862 = sbr.rel (%p860) target = $region74
      $region73: #{embedding_lookup.1} parent=5 // pred_region
        %s863 = ssub.s32 %s11, 2
        // Predicated region
        $region75: #{embedding_lookup.1} parent=73 // pred_check
          %p864 = pneg %p66
        $region76: #{embedding_lookup.1} parent=73 // pred_check_branch
          %866 = sbr.rel (%p864) target = $region78
        $region77: #{embedding_lookup.1} parent=73 // pred_region
          %s867 = sand.u32 %s51, 1
          %s868 = scalar_lea.sflag [#allocation6], %s867
          %s869 = sand.u32 %s51, 1
          %s870 = smul.addr %s869, 256
          %s871 = scalar_lea.vmem [#allocation5], %s870
          %872 = dma.done %s868, 4096
        $region78: #{embedding_lookup.1} parent=73 // pred_fallthru
          _
      $region74: #{embedding_lookup.1} parent=5 // pred_fallthru
        _
    $region6: #{embedding_lookup.1} parent=1 // loop_footer
      %s15 = sadd.s32 1, %s11
    $region7: #{embedding_lookup.1} parent=1 // loop_footer_branch
      %10 = sbr.rel target = $region3
    $region8: #{embedding_lookup.1} parent=1 // loop_exit
      _
    %873 = vsyncpa [#allocation6], 1
    %s874 = scalar_lea.sflag [#allocation6], 1
    %875 = vsyncpa %s874, 1
  %876 = vsyncmov [#allocation4]
  %s877 = vpop.sfrf %876
  %p878 = scmp.eq.s32.totalorder %s877, 0
  %p879 = pneg %p878
  %881 = shalt.err (%p879)

</llo_original>
